<compile_context>
chip_gen: v7x
topology: tpu7x:2x2x1
jax: 0.10.0
libtpu: 0.0.40
codegen_flags: <defaults>
</compile_context>

<pallas_src>
import math
import functools

import jax
import jax.numpy as jnp
from jax import lax
from jax.experimental import pallas as pl
from jax.experimental.pallas import tpu as pltpu


def _round_up(x, m):
    return (x + m - 1) // m * m


# ---------------------------------------------------------------------------
# Kernel 1: dense (H->H) + exact GELU + LayerNorm, computed once per row tile.
# ---------------------------------------------------------------------------
def _transform_kernel(x_ref, w1_ref, b1_ref, gamma_ref, beta_ref, h_ref, *, eps):
    x = x_ref[...]                                            # (tm, H) f32
    w1 = w1_ref[...]                                          # (H, H)  f32
    h = jnp.dot(x, w1, preferred_element_type=jnp.float32)
    h = h + b1_ref[...]                                       # (1, H) broadcast

    # exact GELU: 0.5 * x * (1 + erf(x / sqrt(2)))
    h = 0.5 * h * (1.0 + lax.erf(h * (1.0 / math.sqrt(2.0))))

    # LayerNorm over the hidden (lane) axis
    mean = jnp.mean(h, axis=-1, keepdims=True)                # (tm, 1)
    centered = h - mean
    var = jnp.mean(centered * centered, axis=-1, keepdims=True)
    inv = lax.rsqrt(var + eps)
    out = centered * inv * gamma_ref[...] + beta_ref[...]
    h_ref[...] = out.astype(h_ref.dtype)                      # store in matmul dtype


# ---------------------------------------------------------------------------
# Kernel 2: decoder tile  (tm, H) @ (H, tn) + bias, f32 accumulation.
# Grid is (vocab, rows) with vocab OUTER so w2 blocks are fetched once.
# ---------------------------------------------------------------------------
def _decoder_kernel(h_ref, w2_ref, b2_ref, out_ref):
    logits = jnp.dot(h_ref[...], w2_ref[...],
                     preferred_element_type=jnp.float32)      # (tm, tn) f32
    out_ref[...] = logits + b2_ref[...]


def chbert_mlm_head(x, w1, b1, gamma, beta, w2_t, b2, *,
                    eps=1e-12, tm=512, tn=2048,
                    matmul_dtype=jnp.bfloat16,
                    vmem_limit_bytes=48 * 1024 * 1024):
    """CHBertOnlyMLMHead forward.

    x: [B, S, H] f32.  w1: [H, H] (x @ w1 layout == dense.weight.T), b1: [H],
    gamma/beta: [H] (LayerNorm), w2_t: [H, V] (decoder.weight.T), b2: [V].

    tm: row tile (sublane aligned; clamped to the padded row count).
        Suggested: ~256 on v5e, 512-1024 on v6e, 256-512 on v7x (64 MiB VMEM).
    tn: vocab tile (multiple of 128).
    matmul_dtype: decoder operand dtype. bf16 (default) halves the dominant
        w2 HBM stream and uses the native MXU path; f32 gives bit-tight
        agreement with the PyTorch reference. Accumulation is always f32 and
        the transform (dense+GELU+LN) always runs in f32.
    """
    B, S, H = x.shape
    V = w2_t.shape[1]
    M = B * S

    # ---- aligned tiles & padded extents ------------------------------------
    tm_eff = _round_up(min(tm, _round_up(M, 8)), 8)           # sublane aligned
    Mp = _round_up(M, tm_eff)

    tn = _round_up(tn, 128)
    tn_eff = min(tn, _round_up(V, 128))                       # lane aligned
    Vp = _round_up(V, tn_eff)

    # ---- wrapper-side padding (keeps every store lane-dense / unmasked) ----
    x2d = x.reshape(M, H).astype(jnp.float32)
    if Mp != M:
        x2d = jnp.pad(x2d, ((0, Mp - M), (0, 0)))
    if Vp != V:
        w2_t = jnp.pad(w2_t, ((0, 0), (0, Vp - V)))
        b2 = jnp.pad(b2, ((0, Vp - V),))

    # Decoder weight streamed in the matmul dtype (halves bytes for bf16).
    w2_c = w2_t.astype(matmul_dtype)

    w1_f32 = w1.astype(jnp.float32)
    b1_2d = b1.reshape(1, H).astype(jnp.float32)
    gamma_2d = gamma.reshape(1, H).astype(jnp.float32)
    beta_2d = beta.reshape(1, H).astype(jnp.float32)
    b2_2d = b2.reshape(1, Vp).astype(jnp.float32)

    h_itemsize = jnp.dtype(matmul_dtype).itemsize
    n_row_tiles = Mp // tm_eff
    n_vocab_tiles = Vp // tn_eff

    compiler_params = pltpu.CompilerParams(
        dimension_semantics=("parallel",),
        vmem_limit_bytes=vmem_limit_bytes,
    )

    # ------------------- stage 1: transform (dense + GELU + LN) -------------
    transform_cost = pl.CostEstimate(
        flops=2 * Mp * H * H + 10 * Mp * H,
        transcendentals=Mp * H,                               # erf
        bytes_accessed=(Mp * H * 4 + H * H * 4 + 3 * H * 4 + Mp * H * h_itemsize),
    )

    h = pl.pallas_call(
        functools.partial(_transform_kernel, eps=eps),
        out_shape=jax.ShapeDtypeStruct((Mp, H), matmul_dtype),
        grid_spec=pltpu.PrefetchScalarGridSpec(
            num_scalar_prefetch=0,
            grid=(n_row_tiles,),
            in_specs=[
                pl.BlockSpec((tm_eff, H), lambda i: (i, 0)),  # x row tile
                pl.BlockSpec((H, H), lambda i: (0, 0)),       # dense weight (resident)
                pl.BlockSpec((1, H), lambda i: (0, 0)),       # dense bias
                pl.BlockSpec((1, H), lambda i: (0, 0)),       # LN gamma
                pl.BlockSpec((1, H), lambda i: (0, 0)),       # LN beta
            ],
            out_specs=pl.BlockSpec((tm_eff, H), lambda i: (i, 0)),
        ),
        compiler_params=compiler_params,
        cost_estimate=transform_cost,
    )(x2d, w1_f32, b1_2d, gamma_2d, beta_2d)

    # ------------------- stage 2: decoder matmul over the vocab -------------
    # Vocab axis OUTER, rows INNER: each (H, tn) w2 block is DMA'd once and
    # stays resident while all row tiles are multiplied against it.
    decoder_cost = pl.CostEstimate(
        flops=2 * Mp * H * Vp,
        transcendentals=0,
        bytes_accessed=(n_vocab_tiles * Mp * H * h_itemsize   # h re-streamed per vocab tile
                        + H * Vp * h_itemsize                 # w2 streamed once
                        + Vp * 4
                        + Mp * Vp * 4),                       # f32 logits writeback
    )
    # TODO(synk): optionally emit bf16 logits / int8-fp8 w2 for v5e-bound cases.

    out2d = pl.pallas_call(
        _decoder_kernel,
        out_shape=jax.ShapeDtypeStruct((Mp, Vp), jnp.float32),
        grid_spec=pltpu.PrefetchScalarGridSpec(
            num_scalar_prefetch=0,
            grid=(n_vocab_tiles, n_row_tiles),
            in_specs=[
                pl.BlockSpec((tm_eff, H), lambda j, i: (i, 0)),    # h row tile
                pl.BlockSpec((H, tn_eff), lambda j, i: (0, j)),    # w2 tile (fetched once per j)
                pl.BlockSpec((1, tn_eff), lambda j, i: (0, j)),    # decoder bias tile
            ],
            out_specs=pl.BlockSpec((tm_eff, tn_eff), lambda j, i: (i, j)),
        ),
        compiler_params=pltpu.CompilerParams(
            dimension_semantics=("parallel", "parallel"),
            vmem_limit_bytes=vmem_limit_bytes,
        ),
        cost_estimate=decoder_cost,
    )(h, w2_c, b2_2d)

    return out2d[:M, :V].reshape(B, S, V)


def _reference(x, w1, b1, gamma, beta, w2_t, b2, eps=1e-12):
    h = x @ w1 + b1
    h = 0.5 * h * (1.0 + lax.erf(h / jnp.sqrt(2.0)))
    mean = jnp.mean(h, axis=-1, keepdims=True)
    var = jnp.mean((h - mean) ** 2, axis=-1, keepdims=True)
    h = (h - mean) * lax.rsqrt(var + eps) * gamma + beta
    return h @ w2_t + b2


if __name__ == "__main__":
    key = jax.random.PRNGKey(0)
    k_x, k_w1, k_b1, k_g, k_bt, k_w2, k_b2 = jax.random.split(key, 7)

    # ---- test 1: small aligned config, exact f32 decoder path --------------
    B, S, H, V = 2, 8, 32, 128
    x = jax.random.normal(k_x, (B, S, H), dtype=jnp.float32)
    w1 = jax.random.normal(k_w1, (H, H), dtype=jnp.float32) * 0.05    # dense.weight.T
    b1 = jax.random.normal(k_b1, (H,), dtype=jnp.float32) * 0.05      # dense.bias
    gamma = 1.0 + 0.05 * jax.random.normal(k_g, (H,), dtype=jnp.float32)
    beta = 0.05 * jax.random.normal(k_bt, (H,), dtype=jnp.float32)
    w2_t = jax.random.normal(k_w2, (H, V), dtype=jnp.float32) * 0.05  # decoder.weight.T
    b2 = jnp.zeros((V,), dtype=jnp.float32)                           # tied bias

    out = jax.block_until_ready(
        chbert_mlm_head(x, w1, b1, gamma, beta, w2_t, b2,
                        matmul_dtype=jnp.float32))
    ref = _reference(x, w1, b1, gamma, beta, w2_t, b2)
    assert out.shape == (B, S, V)
    assert jnp.allclose(out, ref, atol=1e-4, rtol=1e-4)

    # ---- test 2: default bf16 decoder path, ragged shapes, small tiles -----
    # M and V both need padding; tm=8 / tn=128 forces multiple row AND vocab
    # tiles, exercising the vocab-outer / rows-inner w2-resident schedule.
    B2, S2, V2 = 2, 7, 200
    x2 = jax.random.normal(k_x, (B2, S2, H), dtype=jnp.float32)
    w2_t2 = jax.random.normal(k_w2, (H, V2), dtype=jnp.float32) * 0.05
    b22 = 0.01 * jax.random.normal(k_b2, (V2,), dtype=jnp.float32)

    out2 = jax.block_until_ready(
        chbert_mlm_head(x2, w1, b1, gamma, beta, w2_t2, b22,
                        tm=8, tn=128))                       # default bf16 decoder
    ref2 = _reference(x2, w1, b1, gamma, beta, w2_t2, b22)
    assert out2.shape == (B2, S2, V2)
    assert jnp.allclose(out2, ref2, atol=3e-2, rtol=3e-2)

    print("KERNEL_OK")
</pallas_src>

<mosaic_0001>
module attributes {stable_mosaic.version = 11 : i64} {
  func.func @_transform_kernel(%arg0: i32, %arg1: memref<16x32xf32, #tpu.memory_space<vmem>>, %arg2: memref<32x32xf32, #tpu.memory_space<vmem>>, %arg3: memref<1x32xf32, #tpu.memory_space<vmem>>, %arg4: memref<1x32xf32, #tpu.memory_space<vmem>>, %arg5: memref<1x32xf32, #tpu.memory_space<vmem>>, %arg6: memref<16x32xf32, #tpu.memory_space<vmem>>) attributes {dimension_semantics = [#tpu.dimension_semantics<parallel>], iteration_bounds = array<i64: 1>, scalar_prefetch = 0 : i64, scratch_operands = 0 : i64, tpu.core_type = #tpu.core_type<tc>, window_params = [{transform_indices = @transform_0, window_bounds = array<i64: 16, 32>}, {pipeline_mode = #tpu.pipeline_mode<synchronous>, transform_indices = @transform_1, window_bounds = array<i64: 32, 32>}, {pipeline_mode = #tpu.pipeline_mode<synchronous>, transform_indices = @transform_2, window_bounds = array<i64: 1, 32>}, {pipeline_mode = #tpu.pipeline_mode<synchronous>, transform_indices = @transform_3, window_bounds = array<i64: 1, 32>}, {pipeline_mode = #tpu.pipeline_mode<synchronous>, transform_indices = @transform_4, window_bounds = array<i64: 1, 32>}, {transform_indices = @transform_5, window_bounds = array<i64: 16, 32>}]} {
    %c0 = arith.constant 0 : index
    %c0_0 = arith.constant 0 : index
    %0 = vector.load %arg1[%c0, %c0_0] : memref<16x32xf32, #tpu.memory_space<vmem>>, vector<16x32xf32>
    %c0_1 = arith.constant 0 : index
    %c0_2 = arith.constant 0 : index
    %1 = vector.load %arg2[%c0_1, %c0_2] : memref<32x32xf32, #tpu.memory_space<vmem>>, vector<32x32xf32>
    %cst = arith.constant dense<0.000000e+00> : vector<16x32xf32>
    %2 = tpu.matmul %0, %1, %cst {dimension_numbers = #tpu.dot_dimension_numbers<[1], [0], [0], [1], [0, 0, 1, 1], [], []>} : vector<16x32xf32>, vector<32x32xf32>, vector<16x32xf32> -> vector<16x32xf32>
    %c0_3 = arith.constant 0 : index
    %c0_4 = arith.constant 0 : index
    %3 = vector.load %arg3[%c0_3, %c0_4] : memref<1x32xf32, #tpu.memory_space<vmem>>, vector<1x32xf32>
    %4 = vector.broadcast %3 : vector<1x32xf32> to vector<16x32xf32>
    %5 = arith.addf %2, %4 : vector<16x32xf32>
    %cst_5 = arith.constant 5.000000e-01 : f32
    %6 = vector.broadcast %cst_5 : f32 to vector<16x32xf32>
    %7 = arith.mulf %6, %5 : vector<16x32xf32>
    %cst_6 = arith.constant 0.707106769 : f32
    %8 = vector.broadcast %cst_6 : f32 to vector<16x32xf32>
    %9 = arith.mulf %5, %8 : vector<16x32xf32>
    %10 = math.erf %9 : vector<16x32xf32>
    %cst_7 = arith.constant 1.000000e+00 : f32
    %11 = vector.broadcast %cst_7 : f32 to vector<16x32xf32>
    %12 = arith.addf %11, %10 : vector<16x32xf32>
    %13 = arith.mulf %7, %12 : vector<16x32xf32>
    %cst_8 = arith.constant dense<0.000000e+00> : vector<16xf32>
    %14 = vector.multi_reduction <add>, %13, %cst_8 [1] : vector<16x32xf32> to vector<16xf32>
    %15 = vector.shape_cast %14 : vector<16xf32> to vector<16x1xf32>
    %cst_9 = arith.constant 3.200000e+01 : f32
    %16 = vector.broadcast %cst_9 : f32 to vector<16x1xf32>
    %17 = arith.divf %15, %16 : vector<16x1xf32>
    %18 = vector.broadcast %17 : vector<16x1xf32> to vector<16x32xf32>
    %19 = arith.subf %13, %18 : vector<16x32xf32>
    %20 = arith.mulf %19, %19 : vector<16x32xf32>
    %cst_10 = arith.constant dense<0.000000e+00> : vector<16xf32>
    %21 = vector.multi_reduction <add>, %20, %cst_10 [1] : vector<16x32xf32> to vector<16xf32>
    %22 = vector.shape_cast %21 : vector<16xf32> to vector<16x1xf32>
    %cst_11 = arith.constant 3.200000e+01 : f32
    %23 = vector.broadcast %cst_11 : f32 to vector<16x1xf32>
    %24 = arith.divf %22, %23 : vector<16x1xf32>
    %cst_12 = arith.constant 9.99999996E-13 : f32
    %25 = vector.broadcast %cst_12 : f32 to vector<16x1xf32>
    %26 = arith.addf %24, %25 : vector<16x1xf32>
    %27 = math.rsqrt %26 : vector<16x1xf32>
    %28 = vector.broadcast %27 : vector<16x1xf32> to vector<16x32xf32>
    %29 = arith.mulf %19, %28 : vector<16x32xf32>
    %c0_13 = arith.constant 0 : index
    %c0_14 = arith.constant 0 : index
    %30 = vector.load %arg4[%c0_13, %c0_14] : memref<1x32xf32, #tpu.memory_space<vmem>>, vector<1x32xf32>
    %31 = vector.broadcast %30 : vector<1x32xf32> to vector<16x32xf32>
    %32 = arith.mulf %29, %31 : vector<16x32xf32>
    %c0_15 = arith.constant 0 : index
    %c0_16 = arith.constant 0 : index
    %33 = vector.load %arg5[%c0_15, %c0_16] : memref<1x32xf32, #tpu.memory_space<vmem>>, vector<1x32xf32>
    %34 = vector.broadcast %33 : vector<1x32xf32> to vector<16x32xf32>
    %35 = arith.addf %32, %34 : vector<16x32xf32>
    %c0_17 = arith.constant 0 : index
    %c0_18 = arith.constant 0 : index
    %36 = vector.load %arg6[%c0_17, %c0_18] : memref<16x32xf32, #tpu.memory_space<vmem>>, vector<16x32xf32>
    tpu.vector_store %arg6[%c0_17, %c0_18], %35 {strides = array<i32>} : memref<16x32xf32, #tpu.memory_space<vmem>>, vector<16x32xf32>,
    return
  }
  func.func @transform_0(%arg0: i32) -> (i32, i32) {
    %c0_i32 = arith.constant 0 : i32
    %c0_i32_0 = arith.constant 0 : i32
    return %arg0, %c0_i32 : i32, i32
  }
  func.func @transform_1(%arg0: i32) -> (i32, i32) {
    %c0_i32 = arith.constant 0 : i32
    %c0_i32_0 = arith.constant 0 : i32
    %c0_i32_1 = arith.constant 0 : i32
    return %c0_i32, %c0_i32_0 : i32, i32
  }
  func.func @transform_2(%arg0: i32) -> (i32, i32) {
    %c0_i32 = arith.constant 0 : i32
    %c0_i32_0 = arith.constant 0 : i32
    %c0_i32_1 = arith.constant 0 : i32
    return %c0_i32, %c0_i32_0 : i32, i32
  }
  func.func @transform_3(%arg0: i32) -> (i32, i32) {
    %c0_i32 = arith.constant 0 : i32
    %c0_i32_0 = arith.constant 0 : i32
    %c0_i32_1 = arith.constant 0 : i32
    return %c0_i32, %c0_i32_0 : i32, i32
  }
  func.func @transform_4(%arg0: i32) -> (i32, i32) {
    %c0_i32 = arith.constant 0 : i32
    %c0_i32_0 = arith.constant 0 : i32
    %c0_i32_1 = arith.constant 0 : i32
    return %c0_i32, %c0_i32_0 : i32, i32
  }
  func.func @transform_5(%arg0: i32) -> (i32, i32) {
    %c0_i32 = arith.constant 0 : i32
    %c0_i32_0 = arith.constant 0 : i32
    return %arg0, %c0_i32 : i32, i32
  }
}

</mosaic_0001>

<llo_original>
// kernel: tpu_custom_call.1
$region0: #{tpu_custom_call.1}
  #allocation0 [shape = 'u32[]', space=smem, size = 0x4, offset = 0x4, fixed_abs, tag = 'smem constant byte address 0x4 - core index']
  #allocation1 [shape = 'u32[144,128]{1,0:T(1,128)}', space=vmem, size = 0x12000, scoped, tag = 'internal scratch']
  %s0 = inlined_call_operand.hbm [shape: f32[16,32], index: 0, kind: input, shape index: {}]
  %s1 = inlined_call_operand.hbm [shape: f32[32,32], index: 1, kind: input, shape index: {}]
  %s2 = inlined_call_operand.vmem [shape: f32[1,32], index: 2, kind: input, shape index: {}]
  %s3 = inlined_call_operand.vmem [shape: f32[1,32], index: 3, kind: input, shape index: {}]
  %s4 = inlined_call_operand.vmem [shape: f32[1,32], index: 4, kind: input, shape index: {}]
  %s5 = inlined_call_operand.hbm [shape: f32[16,32], index: 5, kind: output, shape index: {}]
  %s6 = sld [smem:[#allocation0]]
  $region38: #{tpu_custom_call.1} parent=0
    _
  %s8 = ssub.s32 1, %s6
  %s9 = scalar_select 0, %s8, %s6
  $region1: #{tpu_custom_call.1} parent=0
    #allocation2 [shape = 'u8[8192]{0}', space=vmem, size = 0x2000, scoped, tag = 'input window, operand 0, single buffered']
    #allocation3 [shape = 's32[1]{0}', space=sflag, size = 0x4, scoped, tag = 'scoped memory for tpu_custom_call.1']
    #allocation4 [shape = 's32[1]{0}', space=sflag, size = 0x4, scoped, tag = 'scoped memory for tpu_custom_call.1']
    #allocation5 [shape = 'u8[16384]{0}', space=vmem, size = 0x4000, scoped, tag = 'input window, operand 1, single buffered']
    #allocation6 [shape = 's32[1]{0}', space=sflag, size = 0x4, scoped, tag = 'scoped memory for tpu_custom_call.1']
    #allocation7 [shape = 'u8[8192]{0}', space=vmem, size = 0x2000, scoped, tag = 'output window, operand 0, single buffered']
    %10 = vsyncpa [#allocation3], 0
    %11 = vsyncpa [#allocation6], 0
    %12 = vsyncpa [#allocation4], 0
    // Predicated region
    $region2: #{tpu_custom_call.1} parent=1 // pred_check
      _
    $region3: #{tpu_custom_call.1} parent=1 // pred_check_branch
      %14 = sbr.rel (0) target = $region5
    $region4: #{tpu_custom_call.1} parent=1 // pred_region
      %s16 = ssub.s32 256, 256
      %17 = vsyncadd [#allocation3], %s16
      %s18 = sshll.u32 [#allocation2], 4
      %s19 = int_to_ptr.vmem [resolvable:$true] %s18
      %24 = dma.hbm_to_vmem [thread:$0]  %s0, 256, %s19, [#allocation3], 128, 128, 8
    $region5: #{tpu_custom_call.1} parent=1 // pred_fallthru
      _
    // Predicated region
    $region6: #{tpu_custom_call.1} parent=1 // pred_check
      _
    $region7: #{tpu_custom_call.1} parent=1 // pred_check_branch
      %26 = sbr.rel (0) target = $region9
    $region8: #{tpu_custom_call.1} parent=1 // pred_region
      %s28 = ssub.s32 512, 512
      %29 = vsyncadd [#allocation6], %s28
      %s30 = sshll.u32 [#allocation5], 4
      %s31 = int_to_ptr.vmem [resolvable:$true] %s30
      %36 = dma.hbm_to_vmem [thread:$0]  %s1, 512, %s31, [#allocation6], 128, 128, 8
    $region9: #{tpu_custom_call.1} parent=1 // pred_fallthru
      _
    // Predicated region
    $region10: #{tpu_custom_call.1} parent=1 // pred_check
      _
    $region11: #{tpu_custom_call.1} parent=1 // pred_check_branch
      %38 = sbr.rel (0) target = $region13
    $region12: #{tpu_custom_call.1} parent=1 // pred_region
      _
    $region13: #{tpu_custom_call.1} parent=1 // pred_fallthru
      _
    // Predicated region
    $region14: #{tpu_custom_call.1} parent=1 // pred_check
      _
    $region15: #{tpu_custom_call.1} parent=1 // pred_check_branch
      %40 = sbr.rel (0) target = $region17
    $region16: #{tpu_custom_call.1} parent=1 // pred_region
      _
    $region17: #{tpu_custom_call.1} parent=1 // pred_fallthru
      _
    // Predicated region
    $region18: #{tpu_custom_call.1} parent=1 // pred_check
      _
    $region19: #{tpu_custom_call.1} parent=1 // pred_check_branch
      %42 = sbr.rel (0) target = $region21
    $region20: #{tpu_custom_call.1} parent=1 // pred_region
      _
    $region21: #{tpu_custom_call.1} parent=1 // pred_fallthru
      _
    // Predicated region
    $region22: #{tpu_custom_call.1} parent=1 // pred_check
      _
    $region23: #{tpu_custom_call.1} parent=1 // pred_check_branch
      %44 = sbr.rel (0) target = $region25
    $region24: #{tpu_custom_call.1} parent=1 // pred_region
      %45 = dma.done [#allocation3], 256
    $region25: #{tpu_custom_call.1} parent=1 // pred_fallthru
      _
    // Predicated region
    $region26: #{tpu_custom_call.1} parent=1 // pred_check
      _
    $region27: #{tpu_custom_call.1} parent=1 // pred_check_branch
      %47 = sbr.rel (0) target = $region29
    $region28: #{tpu_custom_call.1} parent=1 // pred_region
      %48 = dma.done [#allocation6], 512
    $region29: #{tpu_custom_call.1} parent=1 // pred_fallthru
      _
    %v49 = vld [vmem:[#allocation2] sm:$0xff]
    %v50 = vld [vmem:[#allocation2 + $0x8] sm:$0xff]
    %v51 = vld [vmem:[#allocation5] sm:$0xff]
    %v52 = vld [vmem:[#allocation5 + $0x8] sm:$0xff]
    %v53 = vld [vmem:[#allocation5 + $0x10] sm:$0xff]
    %v54 = vld [vmem:[#allocation5 + $0x18] sm:$0xff]
    %v55 = vld [vmem:[%s2] sm:$0x1]
    %v57 = vlaneseq
    %v58 = vshrl.u32 %v57, 7
    %v59 = vsub.s32 0, %v58
    %v60 = vrot.slane %v55, %v59
    %vm62 = vcmask 261120
    %v64 = vsel %vm62, %v49, 0
    %v67 = vsel %vm62, %v50, 0
    %69 = vmatprep.subr.mxu0 0.0
    %70 = vmatpush1.msra.mxu0 %v51
    %71 = vmatprep.subr.mxu0 0.0
    %72 = vmatpush1.msra.mxu0 %v52
    %73 = vmatprep.subr.mxu0 0.0
    %74 = vmatpush1.msra.mxu0 %v53
    %75 = vmatprep.subr.mxu0 0.0
    %76 = vmatpush1.msra.mxu0 %v54
    %77 = vmatprep.subr.mxu0 0.0
    %78 = vmatpush1.msra.mxu0 0.0
    %79 = vmatprep.subr.mxu0 0.0
    %80 = vmatpush1.msra.mxu0 0.0
    %81 = vmatprep.subr.mxu0 0.0
    %82 = vmatpush1.msra.mxu0 0.0
    %83 = vmatprep.subr.mxu0 0.0
    %84 = vmatpush1.msra.mxu0 0.0
    %85 = vmatprep.subr.mxu0 0.0
    %86 = vmatpush1.msra.mxu0 0.0
    %87 = vmatprep.subr.mxu0 0.0
    %88 = vmatpush1.msra.mxu0 0.0
    %89 = vmatprep.subr.mxu0 0.0
    %90 = vmatpush1.msra.mxu0 0.0
    %91 = vmatprep.subr.mxu0 0.0
    %92 = vmatpush1.msra.mxu0 0.0
    %93 = vmatprep.subr.mxu0 0.0
    %94 = vmatpush1.msra.mxu0 0.0
    %95 = vmatprep.subr.mxu0 0.0
    %96 = vmatpush1.msra.mxu0 0.0
    %97 = vmatprep.subr.mxu0 0.0
    %98 = vmatpush1.msra.mxu0 0.0
    %99 = vmatprep.subr.mxu0 0.0
    %100 = vmatpush1.msra.mxu0 0.0
    %101 = vmatprep.subr.mxu0 0.0
    %102 = vmatpush1.msra.mxu0 0.0
    %103 = vmatprep.subr.mxu0 0.0
    %104 = vmatpush1.msra.mxu0 0.0
    %105 = vmatprep.subr.mxu0 0.0
    %106 = vmatpush1.msra.mxu0 0.0
    %107 = vmatprep.subr.mxu0 0.0
    %108 = vmatpush1.msra.mxu0 0.0
    %109 = vmatprep.subr.mxu0 0.0
    %110 = vmatpush1.msra.mxu0 0.0
    %111 = vmatprep.subr.mxu0 0.0
    %112 = vmatpush1.msra.mxu0 0.0
    %113 = vmatprep.subr.mxu0 0.0
    %114 = vmatpush1.msra.mxu0 0.0
    %115 = vmatprep.subr.mxu0 0.0
    %116 = vmatpush1.msra.mxu0 0.0
    %117 = vmatprep.subr.mxu0 0.0
    %118 = vmatpush1.msra.mxu0 0.0
    %119 = vmatprep.subr.mxu0 0.0
    %120 = vmatpush1.msra.mxu0 0.0
    %121 = vmatprep.subr.mxu0 0.0
    %122 = vmatpush1.msra.mxu0 0.0
    %123 = vmatprep.subr.mxu0 0.0
    %124 = vmatpush1.msra.mxu0 0.0
    %125 = vmatprep.subr.mxu0 0.0
    %126 = vmatpush1.msra.mxu0 0.0
    %127 = vmatprep.subr.mxu0 0.0
    %128 = vmatpush1.msra.mxu0 0.0
    %129 = vmatprep.subr.mxu0 0.0
    %130 = vmatpush1.msra.mxu0 0.0
    %131 = vmatprep.subr.mxu0 0.0
    %132 = vmatpush1.msra.mxu0 0.0
    %133 = vmatprep.mubr.f32.mxu0 0.0
    %134 = vmatmul.mubr.f32.gmra.mrb[0].mxu0 %v64
    %v135 = vpop.f32.mrb[0].mxu0
    %v136 = vadd.f32 %v60, %v135
    %v137 = vpop.f32.mrb[0].mxu0
    %138 = vmatprep.mubr.f32.mxu0 0.0
    %139 = vmatmul.mubr.f32.gmra.mrb[0].mxu0 %v67
    %v140 = vpop.f32.mrb[0].mxu0
    %v141 = vadd.f32 %v60, %v140
    %v142 = vpop.f32.mrb[0].mxu0
    %143 = vdwg.mxu0
    %v144 = vmul.f32 %v136, 0.5
    %v145 = vmul.f32 %v141, 0.5
    %v146 = vmul.f32 %v136, 0.70710677
    %v147 = vmul.f32 %v141, 0.70710677
    %v148 = verf.f32.pop %v146
    %v149 = verf.f32.pop %v147
    %v150 = vadd.f32 %v148, 1.0
    %v151 = vadd.f32 %v149, 1.0
    %v152 = vmul.f32 %v144, %v150
    %v153 = vmul.f32 %v145, %v151
    %v154 = vsel %vm62, %v152, 0.0
    %155 = vadd.xlane.f32.xlu0 %v154
    %v156 = vpop.xlane.xlu0 %155
    %v157 = vsel %vm62, %v153, 0.0
    %158 = vadd.xlane.f32.xlu0 %v157
    %v159 = vpop.xlane.xlu0 %158
    %v160 = vrcp.pop 32.0
    %v161 = vmul.f32 %v156, %v160
    %v162 = vmul.f32 %v159, %v160
    %v163 = vsub.f32 %v152, %v161
    %v164 = vsub.f32 %v153, %v162
    %v165 = vmul.f32 %v163, %v163
    %v166 = vmul.f32 %v164, %v164
    %v167 = vsel %vm62, %v165, 0.0
    %168 = vadd.xlane.f32.xlu0 %v167
    %v169 = vpop.xlane.xlu0 %168
    %v170 = vsel %vm62, %v166, 0.0
    %171 = vadd.xlane.f32.xlu0 %v170
    %v172 = vpop.xlane.xlu0 %171
    %v173 = vmul.f32 %v169, %v160
    %v174 = vmul.f32 %v172, %v160
    %v175 = vadd.f32 %v173, 1e-12
    %v176 = vadd.f32 %v174, 1e-12
    %v177 = vrsqrt.pop %v175
    %v178 = vrsqrt.pop %v176
    %v179 = vmul.f32 %v163, %v177
    %v180 = vmul.f32 %v164, %v178
    %v181 = vld [vmem:[%s3] sm:$0x1]
    %v183 = vlaneseq
    %v184 = vshrl.u32 %v183, 7
    %v185 = vsub.s32 0, %v184
    %v186 = vrot.slane %v181, %v185
    %v188 = vmul.f32 %v179, %v186
    %v189 = vmul.f32 %v180, %v186
    %v190 = vld [vmem:[%s4] sm:$0x1]
    %v192 = vlaneseq
    %v193 = vshrl.u32 %v192, 7
    %v194 = vsub.s32 0, %v193
    %v195 = vrot.slane %v190, %v194
    %v197 = vadd.f32 %v188, %v195
    %v198 = vadd.f32 %v189, %v195
    %199 = vst.msk [vmem:[#allocation7] sm:$0xff] %vm62, %v197
    %200 = vst.msk [vmem:[#allocation7 + $0x8] sm:$0xff] %vm62, %v198
    // Predicated region
    $region30: #{tpu_custom_call.1} parent=1 // pred_check
      _
    $region31: #{tpu_custom_call.1} parent=1 // pred_check_branch
      %202 = sbr.rel (0) target = $region33
    $region32: #{tpu_custom_call.1} parent=1 // pred_region
      %s204 = ssub.s32 256, 256
      %205 = vsyncadd [#allocation4], %s204
      %s206 = sshll.u32 [#allocation7], 4
      %s207 = int_to_ptr.vmem [resolvable:$true] %s206
      %212 = dma.vmem_to_hbm [thread:$0]  %s207, 256, %s5, [#allocation4], 128, 128, 8
    $region33: #{tpu_custom_call.1} parent=1 // pred_fallthru
      _
    // Predicated region
    $region34: #{tpu_custom_call.1} parent=1 // pred_check
      _
    $region35: #{tpu_custom_call.1} parent=1 // pred_check_branch
      %214 = sbr.rel (0) target = $region37
    $region36: #{tpu_custom_call.1} parent=1 // pred_region
      %215 = dma.done [#allocation4], 256
    $region37: #{tpu_custom_call.1} parent=1 // pred_fallthru
      _
    %216 = vsyncpa [#allocation3], 1
    %217 = vsyncpa [#allocation6], 1
    %218 = vsyncpa [#allocation4], 1

</llo_original>
